<compile_context>
chip_gen: v6e
topology: v6e:2x2x1
jax: 0.10.0
libtpu: 0.0.40
codegen_flags: <defaults>
</compile_context>

<pallas_src>
import functools
import math

import jax
import jax.numpy as jnp
from jax import lax
from jax.experimental import pallas as pl
from jax.experimental.pallas import tpu as pltpu


_VMEM_WORKING_SET_BUDGET = 24 << 20   # slack under the 32 MiB scoped limit (v7x-safe)
_TARGET_IN_TILE_BYTES = 2 << 20       # ~2 MiB input DMAs: 85%+ of HBM roofline
_VMEM_LIMIT_BYTES = 32 * 1024 * 1024


def _cdiv(a: int, b: int) -> int:
    return -(-a // b)


def _normalize_contrast(x, lo, hi, contrast):
    """(x - lo)/(hi - lo) clipped to [0,1], then **contrast (safe at 0)."""
    inv = pl.reciprocal(hi - lo + jnp.float32(1e-8), approx=True)   # EUP vrcp
    xn = jnp.clip((x - lo) * inv, 0.0, 1.0)
    # pow via EUP log/exp; guarded so 0**c == 0 without NaN.
    return jnp.where(
        xn > 0.0,
        jnp.exp(jnp.float32(contrast) * jnp.log(jnp.maximum(xn, jnp.float32(1e-12)))),
        jnp.float32(0.0),
    )


# ------------------------- flat lane-dense path -------------------------

def _tags_kernel_flat(img_ref, tag_ref, out_ref, *, contrast):
    """(TN, H*W) block = TN whole images per grid step."""
    x = img_ref[...].astype(jnp.float32)
    lo = jnp.min(x, axis=1, keepdims=True)        # per-image reduction
    hi = jnp.max(x, axis=1, keepdims=True)
    xc = _normalize_contrast(x, lo, hi, contrast)
    # (1, HW) tag broadcasts across the TN image rows in the multiply.
    out_ref[...] = (xc * tag_ref[...]).astype(out_ref.dtype)


def _plan_flat_tn(n, hw, in_itemsize, out_itemsize):
    """Images per flat block, or None -> row-tiled large-image path.

    Working set counted: double-buffered input + output tiles plus one f32
    tag copy (tag uses Buffered(1)); even if single-buffering were ignored the
    worst case stays < 32 MiB scoped / 64 MiB physical (v7x-safe).
    """
    tag_bytes = hw * 4
    per_img = 2 * hw * (in_itemsize + out_itemsize)
    avail = _VMEM_WORKING_SET_BUDGET - tag_bytes
    if avail < per_img:
        return None                                # one image already too big (covers n == 1)

    tn = max(1, _TARGET_IN_TILE_BYTES // (hw * in_itemsize))
    tn = min(tn, avail // per_img)

    # Don't collapse the grid: keep >= ~8 steps so DMA/compute overlap and the
    # batch axis can shard across v7x's two TensorCores.
    if n >= 16:
        tn = min(tn, max(8, n // 8))

    if tn >= n:
        return n                                   # full-dim block, no alignment needed
    tn = (tn // 8) * 8                             # partial blocks: sublane-aligned
    if tn == 0:
        return None                                # cannot split legally within budget

    # Prefer an even number of grid steps (balanced megacore split on v7x).
    while tn > 8 and _cdiv(n, tn) % 2 == 1:
        tn -= 8
    return tn


# -------------------- row-tiled two-pass large-image path --------------------

def _minmax_kernel(img_ref, lo_ref, hi_ref, *, H, TH):
    """Running per-image min/max over row tiles; (1,1,1) outputs are accumulators."""
    r = pl.program_id(1)

    @pl.when(r == 0)
    def _():
        lo_ref[...] = jnp.full(lo_ref.shape, jnp.inf, lo_ref.dtype)
        hi_ref[...] = jnp.full(hi_ref.shape, -jnp.inf, hi_ref.dtype)

    x = img_ref[...].astype(jnp.float32)           # (1, TH, W)
    if H % TH != 0:                                # mask padded rows in the last tile
        rows = r * TH + lax.broadcasted_iota(jnp.int32, x.shape, 1)
        valid = rows < H
        x_lo = jnp.where(valid, x, jnp.inf)
        x_hi = jnp.where(valid, x, -jnp.inf)
    else:
        x_lo = x_hi = x
    lo_ref[...] = jnp.minimum(lo_ref[...], jnp.min(x_lo, axis=(0, 1, 2), keepdims=True))
    hi_ref[...] = jnp.maximum(hi_ref[...], jnp.max(x_hi, axis=(0, 1, 2), keepdims=True))


def _tags_kernel_rows(img_ref, lo_ref, hi_ref, ty_ref, tx_ref, out_ref, *, contrast):
    """Normalize + contrast + tag one (1, TH, W) row tile; tag built in-kernel."""
    x = img_ref[...].astype(jnp.float32)           # (1, TH, W)
    xc = _normalize_contrast(x, lo_ref[...], hi_ref[...], contrast)
    tag = ty_ref[...] * tx_ref[...]                # (TH,1) * (1,W) -> (TH, W)
    out_ref[...] = (xc * tag[None, :, :]).astype(out_ref.dtype)


def _plan_row_tile(H, W, in_itemsize, out_itemsize):
    """Rows per tile for the large-image path (multiple of 8, or all of H)."""
    per_row = 2 * W * (in_itemsize + out_itemsize)          # double-buffered in+out
    th = max(1, _TARGET_IN_TILE_BYTES // (W * in_itemsize))
    th = min(th, max(1, _VMEM_WORKING_SET_BUDGET // per_row))
    if th >= H:
        return H
    th = max(8, (th // 8) * 8)
    return min(th, H)


# ------------------------------- wrapper -------------------------------

def simulate_tags(img: jax.Array, spacing: float = 5.0, contrast: float = 0.4,
                  label=None, myo_index: int = 2, *,
                  _force_large_image_path: bool = False) -> jax.Array:
    """Apply SPAMM grid-tag simulation to an image of shape [..., H, W]."""
    del label, myo_index  # TODO(synk): label-based myocardium intensity re-weighting
    orig_shape = img.shape
    if len(orig_shape) < 2:
        raise ValueError("SimulateTags expects an input of shape [..., H, W]")
    H, W = int(orig_shape[-2]), int(orig_shape[-1])
    n = int(math.prod(orig_shape[:-2])) if len(orig_shape) > 2 else 1
    hw = H * W

    out_dtype = img.dtype if jnp.issubdtype(img.dtype, jnp.floating) else jnp.float32
    in_itemsize = jnp.dtype(img.dtype).itemsize
    out_itemsize = jnp.dtype(out_dtype).itemsize

    # Separable tag pattern: H + W sins, computed once outside the kernel.
    omega = jnp.float32(math.pi / float(spacing))
    ty = jnp.sin(omega * jnp.arange(H, dtype=jnp.float32)) ** 2     # (H,)
    tx = jnp.sin(omega * jnp.arange(W, dtype=jnp.float32)) ** 2     # (W,)

    tn = None if _force_large_image_path else _plan_flat_tn(n, hw, in_itemsize, out_itemsize)

    if tn is not None:
        # Lane-dense batched path: whole images along the lane axis.
        x2 = img.reshape(n, hw)
        tag = (ty[:, None] * tx[None, :]).reshape(1, hw)
        out = pl.pallas_call(
            functools.partial(_tags_kernel_flat, contrast=float(contrast)),
            out_shape=jax.ShapeDtypeStruct((n, hw), out_dtype),
            grid=(_cdiv(n, tn),),
            in_specs=[
                pl.BlockSpec((tn, hw), lambda i: (i, 0)),
                # Constant-index, VMEM-resident tag: a single buffer suffices.
                pl.BlockSpec((1, hw), lambda i: (0, 0), pipeline_mode=pl.Buffered(1)),
            ],
            out_specs=pl.BlockSpec((tn, hw), lambda i: (i, 0)),
            compiler_params=pltpu.CompilerParams(
                dimension_semantics=("parallel",),            # megacore sharding on v7x
                vmem_limit_bytes=_VMEM_LIMIT_BYTES,
            ),
        )(x2, tag)
        return out.reshape(orig_shape)

    # Row-tiled two-pass path for images too large for the flat-path budget.
    x3 = img.reshape(n, H, W)
    th = _plan_row_tile(H, W, in_itemsize, out_itemsize)
    nr = _cdiv(H, th)

    # Pass 1: per-image min/max, accumulated in resident (1,1,1) output blocks.
    lo, hi = pl.pallas_call(
        functools.partial(_minmax_kernel, H=H, TH=th),
        out_shape=(
            jax.ShapeDtypeStruct((n, 1, 1), jnp.float32),
            jax.ShapeDtypeStruct((n, 1, 1), jnp.float32),
        ),
        grid=(n, nr),
        in_specs=[pl.BlockSpec((1, th, W), lambda i, r: (i, r, 0))],
        out_specs=(
            pl.BlockSpec((1, 1, 1), lambda i, r: (i, 0, 0)),
            pl.BlockSpec((1, 1, 1), lambda i, r: (i, 0, 0)),
        ),
        compiler_params=pltpu.CompilerParams(
            dimension_semantics=("parallel", "arbitrary"),    # r is the reduction axis
            vmem_limit_bytes=_VMEM_LIMIT_BYTES,
        ),
    )(x3)

    # Pass 2: normalize + contrast + tag; tag formed in-kernel from ty x tx,
    # so no (H, W) tag is DMA'd or resident in VMEM.
    out = pl.pallas_call(
        functools.partial(_tags_kernel_rows, contrast=float(contrast)),
        out_shape=jax.ShapeDtypeStruct((n, H, W), out_dtype),
        grid=(n, nr),
        in_specs=[
            pl.BlockSpec((1, th, W), lambda i, r: (i, r, 0)),
            pl.BlockSpec((1, 1, 1), lambda i, r: (i, 0, 0)),
            pl.BlockSpec((1, 1, 1), lambda i, r: (i, 0, 0)),
            pl.BlockSpec((th, 1), lambda i, r: (r, 0)),
            pl.BlockSpec((1, W), lambda i, r: (0, 0), pipeline_mode=pl.Buffered(1)),
        ],
        out_specs=pl.BlockSpec((1, th, W), lambda i, r: (i, r, 0)),
        compiler_params=pltpu.CompilerParams(
            dimension_semantics=("parallel", "parallel"),
            vmem_limit_bytes=_VMEM_LIMIT_BYTES,
        ),
    )(x3, lo, hi, ty[:, None], tx[None, :])
    return out.reshape(orig_shape)


def _reference(img, spacing=5.0, contrast=0.4):
    """Pure-JAX reference for sanity checking."""
    lo = img.min(axis=(-2, -1), keepdims=True)
    hi = img.max(axis=(-2, -1), keepdims=True)
    xn = jnp.clip((img - lo) / (hi - lo + 1e-8), 0.0, 1.0)
    xc = xn ** contrast
    H, W = img.shape[-2:]
    ty = jnp.sin(jnp.pi * jnp.arange(H, dtype=jnp.float32) / spacing) ** 2
    tx = jnp.sin(jnp.pi * jnp.arange(W, dtype=jnp.float32) / spacing) ** 2
    return (xc * (ty[:, None] * tx[None, :])).astype(img.dtype)


if __name__ == "__main__":
    key = jax.random.PRNGKey(0)
    # Small NCHW input consistent with the module's [..., H, W] contract.
    x = jax.random.uniform(key, (2, 4, 16, 16), dtype=jnp.float32,
                           minval=0.0, maxval=255.0)

    r = _reference(x, spacing=5.0, contrast=0.4)

    # Flat lane-dense path (the common case).
    y = jax.block_until_ready(simulate_tags(x, spacing=5.0, contrast=0.4))
    assert y.shape == x.shape and y.dtype == x.dtype
    assert bool(jnp.all(jnp.isfinite(y)))
    # Loose tolerance: kernel uses approx reciprocal + exp/log pow.
    assert bool(jnp.allclose(y, r, atol=1e-2, rtol=1e-2))

    # Row-tiled two-pass large-image path, forced at small shape for coverage.
    y2 = jax.block_until_ready(
        simulate_tags(x, spacing=5.0, contrast=0.4, _force_large_image_path=True))
    assert y2.shape == x.shape and y2.dtype == x.dtype
    assert bool(jnp.all(jnp.isfinite(y2)))
    assert bool(jnp.allclose(y2, r, atol=1e-2, rtol=1e-2))

    print("KERNEL_OK")
</pallas_src>

<mosaic_0001>
module attributes {stable_mosaic.version = 11 : i64} {
  func.func @_tags_kernel_flat(%arg0: i32, %arg1: memref<8x256xf32, #tpu.memory_space<vmem>>, %arg2: memref<1x256xf32, #tpu.memory_space<vmem>>, %arg3: memref<8x256xf32, #tpu.memory_space<vmem>>) attributes {dimension_semantics = [#tpu.dimension_semantics<parallel>], iteration_bounds = array<i64: 1>, scalar_prefetch = 0 : i64, scratch_operands = 0 : i64, tpu.core_type = #tpu.core_type<tc>, window_params = [{transform_indices = @transform_0, window_bounds = array<i64: 8, 256>}, {pipeline_mode = #tpu.pipeline_mode<synchronous>, transform_indices = @transform_1, window_bounds = array<i64: 1, 256>}, {transform_indices = @transform_2, window_bounds = array<i64: 8, 256>}]} {
    %c0 = arith.constant 0 : index
    %c0_0 = arith.constant 0 : index
    %0 = vector.load %arg1[%c0, %c0_0] : memref<8x256xf32, #tpu.memory_space<vmem>>, vector<8x256xf32>
    %cst = arith.constant dense<0x7F800000> : vector<8xf32>
    %1 = vector.multi_reduction <minimumf>, %0, %cst [1] : vector<8x256xf32> to vector<8xf32>
    %2 = vector.shape_cast %1 : vector<8xf32> to vector<8x1xf32>
    %cst_1 = arith.constant dense<0xFF800000> : vector<8xf32>
    %3 = vector.multi_reduction <maximumf>, %0, %cst_1 [1] : vector<8x256xf32> to vector<8xf32>
    %4 = vector.shape_cast %3 : vector<8xf32> to vector<8x1xf32>
    %5 = arith.subf %4, %2 : vector<8x1xf32>
    %cst_2 = arith.constant 9.99999993E-9 : f32
    %6 = vector.broadcast %cst_2 : f32 to vector<8x1xf32>
    %7 = arith.addf %5, %6 : vector<8x1xf32>
    %8 = tpu.reciprocal %7 {approx = true} : vector<8x1xf32> -> vector<8x1xf32>
    %9 = vector.broadcast %2 : vector<8x1xf32> to vector<8x256xf32>
    %10 = arith.subf %0, %9 : vector<8x256xf32>
    %11 = vector.broadcast %8 : vector<8x1xf32> to vector<8x256xf32>
    %12 = arith.mulf %10, %11 : vector<8x256xf32>
    %cst_3 = arith.constant 0.000000e+00 : f32
    %cst_4 = arith.constant 1.000000e+00 : f32
    %13 = vector.broadcast %cst_3 : f32 to vector<8x256xf32>
    %14 = arith.maximumf %13, %12 : vector<8x256xf32>
    %15 = vector.broadcast %cst_4 : f32 to vector<8x256xf32>
    %16 = arith.minimumf %15, %14 : vector<8x256xf32>
    %cst_5 = arith.constant 0.000000e+00 : f32
    %17 = vector.broadcast %cst_5 : f32 to vector<8x256xf32>
    %18 = arith.cmpf ogt, %16, %17 : vector<8x256xf32>
    %cst_6 = arith.constant 9.99999996E-13 : f32
    %19 = vector.broadcast %cst_6 : f32 to vector<8x256xf32>
    %20 = arith.maximumf %16, %19 : vector<8x256xf32>
    %21 = math.log %20 : vector<8x256xf32>
    %cst_7 = arith.constant 4.000000e-01 : f32
    %22 = vector.broadcast %cst_7 : f32 to vector<8x256xf32>
    %23 = arith.mulf %22, %21 : vector<8x256xf32>
    %24 = math.exp %23 : vector<8x256xf32>
    %cst_8 = arith.constant 0.000000e+00 : f32
    %25 = vector.broadcast %cst_8 : f32 to vector<8x256xf32>
    %26 = arith.select %18, %24, %25 : vector<8x256xi1>, vector<8x256xf32>
    %c0_9 = arith.constant 0 : index
    %c0_10 = arith.constant 0 : index
    %27 = vector.load %arg2[%c0_9, %c0_10] : memref<1x256xf32, #tpu.memory_space<vmem>>, vector<1x256xf32>
    %28 = vector.broadcast %27 : vector<1x256xf32> to vector<8x256xf32>
    %29 = arith.mulf %26, %28 : vector<8x256xf32>
    %c0_11 = arith.constant 0 : index
    %c0_12 = arith.constant 0 : index
    %30 = vector.load %arg3[%c0_11, %c0_12] : memref<8x256xf32, #tpu.memory_space<vmem>>, vector<8x256xf32>
    tpu.vector_store %arg3[%c0_11, %c0_12], %29 {strides = array<i32>} : memref<8x256xf32, #tpu.memory_space<vmem>>, vector<8x256xf32>,
    return
  }
  func.func @transform_0(%arg0: i32) -> (i32, i32) {
    %c0_i32 = arith.constant 0 : i32
    %c0_i32_0 = arith.constant 0 : i32
    return %arg0, %c0_i32 : i32, i32
  }
  func.func @transform_1(%arg0: i32) -> (i32, i32) {
    %c0_i32 = arith.constant 0 : i32
    %c0_i32_0 = arith.constant 0 : i32
    %c0_i32_1 = arith.constant 0 : i32
    return %c0_i32, %c0_i32_0 : i32, i32
  }
  func.func @transform_2(%arg0: i32) -> (i32, i32) {
    %c0_i32 = arith.constant 0 : i32
    %c0_i32_0 = arith.constant 0 : i32
    return %arg0, %c0_i32 : i32, i32
  }
}

</mosaic_0001>

<llo_original>
// kernel: tpu_custom_call.1
$region0: #{tpu_custom_call.1}
  #allocation0 [shape = 'u32[]', space=smem, size = 0x4, offset = 0x4, fixed_abs, tag = 'smem constant byte address 0x4 - core index']
  #allocation1 [shape = 'u32[144,128]{1,0:T(1,128)}', space=vmem, size = 0x12000, scoped, tag = 'internal scratch']
  %s0 = inlined_call_operand.hbm [shape: f32[8,256], index: 0, kind: input, shape index: {}]
  %s1 = inlined_call_operand.hbm [shape: f32[1,256], index: 1, kind: input, shape index: {}]
  %s2 = inlined_call_operand.hbm [shape: f32[8,256], index: 2, kind: output, shape index: {}]
  %s3 = sld [smem:[#allocation0]]
  $region26: #{tpu_custom_call.1} parent=0
    _
  %s5 = ssub.s32 1, %s3
  %s6 = scalar_select 0, %s5, %s3
  $region1: #{tpu_custom_call.1} parent=0
    #allocation2 [shape = 'u8[8192]{0}', space=vmem, size = 0x2000, scoped, tag = 'input window, operand 0, single buffered']
    #allocation3 [shape = 's32[1]{0}', space=sflag, size = 0x4, scoped, tag = 'scoped memory for tpu_custom_call.1']
    #allocation4 [shape = 's32[1]{0}', space=sflag, size = 0x4, scoped, tag = 'scoped memory for tpu_custom_call.1']
    #allocation5 [shape = 'u8[1024]{0}', space=vmem, size = 0x400, scoped, tag = 'input window, operand 1, single buffered']
    #allocation6 [shape = 's32[1]{0}', space=sflag, size = 0x4, scoped, tag = 'scoped memory for tpu_custom_call.1']
    #allocation7 [shape = 'u8[8192]{0}', space=vmem, size = 0x2000, scoped, tag = 'output window, operand 0, single buffered']
    %7 = vsyncpa [#allocation3], 0
    %8 = vsyncpa [#allocation6], 0
    %9 = vsyncpa [#allocation4], 0
    // Predicated region
    $region2: #{tpu_custom_call.1} parent=1 // pred_check
      _
    $region3: #{tpu_custom_call.1} parent=1 // pred_check_branch
      %11 = sbr.rel (0) target = $region5
    $region4: #{tpu_custom_call.1} parent=1 // pred_region
      %s13 = ssub.s32 256, 256
      %14 = vsyncadd [#allocation3], %s13
      %s16 = sshll.u32 [#allocation2], 4
      %s17 = int_to_ptr.vmem [resolvable:$true] %s16
      %19 = dma.hbm_to_vmem [thread:$0]  %s0, 256, %s17, [#allocation3]
    $region5: #{tpu_custom_call.1} parent=1 // pred_fallthru
      _
    // Predicated region
    $region6: #{tpu_custom_call.1} parent=1 // pred_check
      _
    $region7: #{tpu_custom_call.1} parent=1 // pred_check_branch
      %21 = sbr.rel (0) target = $region9
    $region8: #{tpu_custom_call.1} parent=1 // pred_region
      %s23 = ssub.s32 32, 32
      %24 = vsyncadd [#allocation6], %s23
      %s26 = sshll.u32 [#allocation5], 4
      %s27 = int_to_ptr.vmem [resolvable:$true] %s26
      %29 = dma.hbm_to_vmem [thread:$0]  %s1, 32, %s27, [#allocation6]
    $region9: #{tpu_custom_call.1} parent=1 // pred_fallthru
      _
    // Predicated region
    $region10: #{tpu_custom_call.1} parent=1 // pred_check
      _
    $region11: #{tpu_custom_call.1} parent=1 // pred_check_branch
      %31 = sbr.rel (0) target = $region13
    $region12: #{tpu_custom_call.1} parent=1 // pred_region
      %32 = dma.done [#allocation3], 256
    $region13: #{tpu_custom_call.1} parent=1 // pred_fallthru
      _
    // Predicated region
    $region14: #{tpu_custom_call.1} parent=1 // pred_check
      _
    $region15: #{tpu_custom_call.1} parent=1 // pred_check_branch
      %34 = sbr.rel (0) target = $region17
    $region16: #{tpu_custom_call.1} parent=1 // pred_region
      %35 = dma.done [#allocation6], 32
    $region17: #{tpu_custom_call.1} parent=1 // pred_fallthru
      _
    %v36 = vld [vmem:[#allocation2] sm:$0xff]
    %v37 = vld [vmem:[#allocation2 + $0x8] sm:$0xff]
    %v38 = vmin.f32 %v36, %v37
    %39 = vmin.xlane.f32.xlu0 %v38
    %v40 = vpop.xlane.xlu0 %39
    %v41 = vmax.f32 %v36, %v37
    %42 = vmax.xlane.f32.xlu0 %v41
    %v43 = vpop.xlane.xlu0 %42
    %v44 = vsub.f32 %v43, %v40
    %v45 = vadd.f32 %v44, 1e-08
    %v46 = vrcp.pop %v45
    %v47 = vsub.f32 %v36, %v40
    %v48 = vsub.f32 %v37, %v40
    %v49 = vmul.f32 %v47, %v46
    %v50 = vmul.f32 %v48, %v46
    %v51 = vmax.f32 %v49, 0.0
    %v52 = vmax.f32 %v50, 0.0
    %v53 = vmin.f32 %v51, 1.0
    %v54 = vmin.f32 %v52, 1.0
    %vm55 = vcmp.gt.f32.partialorder %v53, 0.0
    %vm56 = vcmp.gt.f32.partialorder %v54, 0.0
    %v57 = vmax.f32 %v53, 1e-12
    %v58 = vmax.f32 %v54, 1e-12
    %v59 = vlog2.pop %v57
    %v60 = vmul.f32 %v59, 0.6931472
    %v61 = vlog2.pop %v58
    %v62 = vmul.f32 %v61, 0.6931472
    %v63 = vmul.f32 %v60, 0.4
    %v64 = vmul.f32 %v62, 0.4
    %v65 = vmul.f32 %v63, 1.442695
    %v66 = vpow.pop %v65
    %v67 = vmul.f32 %v64, 1.442695
    %v68 = vpow.pop %v67
    %v69 = vsel %vm55, %v66, 0.0
    %v70 = vsel %vm56, %v68, 0.0
    %v71 = vld [vmem:[#allocation5] sm:$0x3]
    %v73 = vlaneseq
    %v74 = vshrl.u32 %v73, 7
    %v75 = vsub.s32 0, %v74
    %v76 = vrot.slane %v71, %v75
    %v77 = vlaneseq
    %v78 = vshrl.u32 %v77, 7
    %v79 = vsub.s32 1, %v78
    %v80 = vrot.slane %v71, %v79
    %v83 = vmul.f32 %v69, %v76
    %v84 = vmul.f32 %v70, %v80
    %85 = vst [vmem:[#allocation7] sm:$0xff] %v83
    %86 = vst [vmem:[#allocation7 + $0x8] sm:$0xff] %v84
    // Predicated region
    $region18: #{tpu_custom_call.1} parent=1 // pred_check
      _
    $region19: #{tpu_custom_call.1} parent=1 // pred_check_branch
      %88 = sbr.rel (0) target = $region21
    $region20: #{tpu_custom_call.1} parent=1 // pred_region
      %s90 = ssub.s32 256, 256
      %91 = vsyncadd [#allocation4], %s90
      %s93 = sshll.u32 [#allocation7], 4
      %s94 = int_to_ptr.vmem [resolvable:$true] %s93
      %96 = dma.vmem_to_hbm [thread:$0]  %s94, 256, %s2, [#allocation4]
    $region21: #{tpu_custom_call.1} parent=1 // pred_fallthru
      _
    // Predicated region
    $region22: #{tpu_custom_call.1} parent=1 // pred_check
      _
    $region23: #{tpu_custom_call.1} parent=1 // pred_check_branch
      %98 = sbr.rel (0) target = $region25
    $region24: #{tpu_custom_call.1} parent=1 // pred_region
      %99 = dma.done [#allocation4], 256
    $region25: #{tpu_custom_call.1} parent=1 // pred_fallthru
      _
    %100 = vsyncpa [#allocation3], 1
    %101 = vsyncpa [#allocation6], 1
    %102 = vsyncpa [#allocation4], 1

</llo_original>
